<compile_context>
chip_gen: v7x
topology: tpu7x:2x2x1
jax: 0.10.0
libtpu: 0.0.40
codegen_flags: <defaults>
</compile_context>

<pallas_src>
from functools import partial

import numpy as np
import jax
import jax.numpy as jnp
from jax.experimental import pallas as pl
from jax.experimental.pallas import tpu as pltpu

NEG_SLOPE = 0.01   # nn.LeakyReLU default
BN_EPS = 1e-5      # nn.BatchNorm2d default


# ---------------------------------------------------------------------------
# Weight preprocessing (JAX level - touches only weights, never activations).
# ---------------------------------------------------------------------------
def _bn_scale_shift(gamma, beta, mean, var):
    scale = gamma / jnp.sqrt(var + BN_EPS)
    shift = beta - mean * scale
    return scale, shift


def _build_temporal_band(tw, tb, T, t_used):
    """Banded matrix so that x_aug (E, T+1) @ band == conv + bias.

    band[tau, c*t_used + t] = tw[c, tau - t]   for 0 <= tau - t < K, tau < T
    band[T,   c*t_used + t] = tb[c]            (ones column of x_aug)
    """
    C, K = tw.shape
    tau = np.arange(T + 1)
    t = np.arange(t_used)
    k = tau[:, None, None] - t[None, None, :]                    # (T+1, 1, t_used)
    valid = (k >= 0) & (k < K) & (tau[:, None, None] < T)
    c = np.arange(C)
    idx = (c[None, :, None] * K + np.clip(k, 0, K - 1)).astype(np.int32)  # (T+1, C, t_used)
    valid = np.broadcast_to(valid, idx.shape)
    band = jnp.where(jnp.asarray(valid),
                     jnp.reshape(tw, (-1,))[jnp.asarray(idx)], 0.0)
    band = band.at[T].set(jnp.broadcast_to(tb[:, None], (C, t_used)))
    return band.reshape(T + 1, C * t_used)


def _build_pool_matrix(t_scale, t_used, tp, pool):
    """AvgPool(1,pool) + TBatchNorm scale as a matmul: act (E, C*t_used) @ P."""
    C = t_scale.shape[0]
    c_r = np.repeat(np.arange(C), t_used)
    p_r = np.tile(np.arange(t_used) // pool, C)
    c_c = np.repeat(np.arange(C), tp)
    p_c = np.tile(np.arange(tp), C)
    mask = (c_r[:, None] == c_c[None, :]) & (p_r[:, None] == p_c[None, :])
    col_scale = jnp.repeat(t_scale, tp) / float(pool)             # (C*tp,)
    return jnp.where(jnp.asarray(mask), col_scale[None, :], 0.0)  # (C*t_used, C*tp)


def _build_spatial_matrix(sw, loc_list, grid_h, grid_w, kh, F, tps, num_elec):
    """Bake to_grid + spatial Conv2d(kernel=(kh, kh*F), stride=(1, F)) into one
    weight matrix B of shape (C_t*F, E * n_pos * C_s).

    Lane layout of the temporal feature matrix M (E, C_t*F):
        q = qoff(branch) + ci*tp_branch + p      (channel-major within branch).
    Column layout of B: n = e*(n_pos*C_s) + (i*wo + j)*C_s + co.
    The torch kernel's flattened last axis (size kh*F) unpacks as (dw, f) with f
    minor, because the grid image concatenates the F features of each grid cell
    along the width; this is encoded below as index dw*F + f.
    """
    C_s, C_t = int(sw.shape[0]), int(sw.shape[1])
    # Decode q -> (input channel, concatenated-feature index)
    ci_q, f_q = [], []
    foff = 0
    for tp in tps:
        for ci in range(C_t):
            ci_q += [ci] * tp
            f_q += list(range(foff, foff + tp))
        foff += tp
    ci_q = np.asarray(ci_q)
    f_q = np.asarray(f_q)                                          # (Q,)
    ho, wo = grid_h - kh + 1, grid_w - kh + 1
    ii, jj = np.meshgrid(np.arange(ho), np.arange(wo), indexing="ij")
    i_pos, j_pos = ii.reshape(-1), jj.reshape(-1)                  # (n_pos,)
    n_pos = i_pos.size

    gy = np.full((num_elec,), -1000)
    gx = np.full((num_elec,), -1000)
    for e, loc in enumerate(loc_list):
        if loc is None:
            continue
        gy[e], gx[e] = loc
    dh = gy[:, None] - i_pos[None, :]                              # (E, n_pos)
    dw = gx[:, None] - j_pos[None, :]
    inwin = (dh >= 0) & (dh < kh) & (dw >= 0) & (dw < kh)

    co = np.arange(C_s)
    idx = (((co[None, None, None, :] * C_t + ci_q[:, None, None, None]) * kh
            + np.clip(dh, 0, kh - 1)[None, :, :, None]) * (kh * F)
           + np.clip(dw, 0, kh - 1)[None, :, :, None] * F
           + f_q[:, None, None, None]).astype(np.int32)            # (Q, E, n_pos, C_s)
    mask = np.broadcast_to(inwin[None, :, :, None], idx.shape)
    B = jnp.where(jnp.asarray(mask),
                  jnp.reshape(sw, (-1,))[jnp.asarray(idx)], 0.0)
    return B.reshape(idx.shape[0], num_elec * n_pos * C_s), ho, wo, n_pos


def _build_reduce_matrix(s_scale, n_pos, wo, C_s, inv_total):
    """AvgPool(1,2) + SBatchNorm scale + global mean as a (N_s, C_s) matmul."""
    wp = wo // 2
    pos = np.arange(n_pos)
    used = (pos % wo) < 2 * wp                                     # drop odd tail column
    co_r = np.tile(np.arange(C_s), n_pos)                          # row = pos*C_s + co
    used_r = np.repeat(used, C_s)
    eye = (co_r[:, None] == np.arange(C_s)[None, :]) & used_r[:, None]
    val = (s_scale * (0.5 * inv_total))[None, :]
    return jnp.where(jnp.asarray(eye), val, 0.0)                   # (n_pos*C_s, C_s)


# ---------------------------------------------------------------------------
# The fused kernel (one grid step == one batch element).
# ---------------------------------------------------------------------------
def _exp_model_kernel(x_ref,
                      wb1, wb2, wb3,
                      pm1, pm2, pm3,
                      ts1, ts2, ts3,
                      bm1, bm2,
                      sb1, sb2,
                      rm1, rm2,
                      fc1w, fc1b, fc2w, fc2b,
                      o_ref,
                      *, qoffs, n_s, num_elec):
    x = x_ref[0]                                                   # (E, T+1) bf16

    # --- TemporalInceptionBlock: conv + bias (banded matmul), LeakyReLU,
    #     AvgPool(1,8) + TBatchNorm (pool/scale matmul + shift row). ---
    m_parts = []
    for wb, pm, ts in ((wb1, pm1, ts1), (wb2, pm2, ts2), (wb3, pm3, ts3)):
        conv = jnp.dot(x, wb[...], preferred_element_type=jnp.float32)
        act = jnp.maximum(conv, NEG_SLOPE * conv)                  # LeakyReLU
        pooled = jnp.dot(act.astype(jnp.bfloat16), pm[...],
                         preferred_element_type=jnp.float32) + ts[...]
        m_parts.append(pooled.astype(jnp.bfloat16))                # (E, C*tp_i)

    # --- to_grid + SpatialInceptionBlock + head reduction. ---
    feat = None
    for bm, sb, rm, ns in ((bm1, sb1, rm1, n_s[0]), (bm2, sb2, rm2, n_s[1])):
        # Per-electrode contributions, all electrodes at once (lane-dense).
        p_full = jnp.dot(m_parts[0], bm[qoffs[0]:qoffs[1], :],
                         preferred_element_type=jnp.float32)
        for i in (1, 2):
            p_full = p_full + jnp.dot(m_parts[i], bm[qoffs[i]:qoffs[i + 1], :],
                                      preferred_element_type=jnp.float32)
        # Sum the per-electrode diagonal blocks -> spatial conv output row.
        srow = p_full[0:1, 0:ns]
        for e in range(1, num_elec):
            srow = srow + p_full[e:e + 1, e * ns:(e + 1) * ns]
        srow = srow + sb[...]                                      # conv bias
        sact = jnp.maximum(srow, NEG_SLOPE * srow)                 # LeakyReLU
        # AvgPool(1,2) + SBatchNorm scale + mean over positions (all linear).
        contrib = jnp.dot(sact, rm[...], preferred_element_type=jnp.float32)
        feat = contrib if feat is None else feat + contrib         # (1, C_s)

    # --- head: Linear -> ReLU -> (Dropout = identity) -> Linear ---
    h = jnp.dot(feat, fc1w[...], preferred_element_type=jnp.float32) + fc1b[...]
    h = jnp.maximum(h, 0.0)
    logits = jnp.dot(h, fc2w[...], preferred_element_type=jnp.float32) + fc2b[...]
    o_ref[0, :, :] = logits                                        # (1, 128) lane-dense


# ---------------------------------------------------------------------------
# Full forward pass.
# ---------------------------------------------------------------------------
def exp_model_forward(x, params, loc_list, grid_h, grid_w):
    xs = x[:, 0]                                                   # (B, E, T)
    Bsz, E, T = xs.shape
    C_t = params["tw1"].shape[0]
    C_s = params["sw1"].shape[0]
    pool_t = 8

    ksizes = [params[f"tw{i}"].shape[-1] for i in (1, 2, 3)]
    tps = [(T - K + 1) // pool_t for K in ksizes]
    t_useds = [tp * pool_t for tp in tps]
    F = sum(tps)

    t_scale, t_shift = _bn_scale_shift(params["t_gamma"], params["t_beta"],
                                       params["t_mean"], params["t_var"])
    s_scale, s_shift = _bn_scale_shift(params["s_gamma"], params["s_beta"],
                                       params["s_mean"], params["s_var"])

    # Temporal weight preprocessing.
    wbands, pmats, tshift_rows = [], [], []
    for i in range(3):
        tw = params[f"tw{i + 1}"].reshape(C_t, ksizes[i])
        wbands.append(_build_temporal_band(tw, params[f"tb{i + 1}"], T,
                                           t_useds[i]).astype(jnp.bfloat16))
        pmats.append(_build_pool_matrix(t_scale, t_useds[i], tps[i],
                                        pool_t).astype(jnp.bfloat16))
        tshift_rows.append(jnp.repeat(t_shift, tps[i])[None, :].astype(jnp.float32))

    # Spatial weight preprocessing (to_grid map baked into the weights).
    bmats, sbias_rows, n_s_list, geo = [], [], [], []
    for s, kh in enumerate((3, 5)):
        Bm, ho, wo, n_pos = _build_spatial_matrix(params[f"sw{s + 1}"], loc_list,
                                                  grid_h, grid_w, kh, F, tps, E)
        geo.append((ho, wo, n_pos))
        bmats.append(Bm.astype(jnp.bfloat16))
        sbias_rows.append(jnp.tile(params[f"sb{s + 1}"], n_pos)[None, :]
                          .astype(jnp.float32))
        n_s_list.append(n_pos * C_s)
    n_total = sum(ho * (wo // 2) for (ho, wo, _) in geo)
    rmats = [_build_reduce_matrix(s_scale, n_pos, wo, C_s, 1.0 / n_total)
             for (ho, wo, n_pos) in geo]

    # Head weights (SBatchNorm shift folded into fc1 bias; fc2 padded to 128
    # lanes so the HBM store of the logits is a full, unmasked vector store).
    fc1_w = params["fc1_w"].astype(jnp.float32)
    hid = fc1_w.shape[1]
    fc1_b_eff = (params["fc1_b"] + s_shift @ fc1_w)[None, :].astype(jnp.float32)
    ncls = params["fc2_w"].shape[1]
    assert ncls <= 128
    fc2_w_pad = jnp.zeros((hid, 128), jnp.float32).at[:, :ncls].set(params["fc2_w"])
    fc2_b_pad = jnp.zeros((1, 128), jnp.float32).at[0, :ncls].set(params["fc2_b"])

    # Activations: ones column folds the temporal conv bias into the band matmul.
    ones = jnp.ones((Bsz, E, 1), xs.dtype)
    x_aug = jnp.concatenate([xs, ones], axis=-1).astype(jnp.bfloat16)   # (B, E, T+1)

    qoffs = (0,) + tuple(int(v) for v in np.cumsum([C_t * tp for tp in tps]))

    kernel = partial(_exp_model_kernel, qoffs=qoffs, n_s=tuple(n_s_list),
                     num_elec=E)

    weight_args = (wbands + pmats + tshift_rows + bmats + sbias_rows + rmats
                   + [fc1_w, fc1_b_eff, fc2_w_pad, fc2_b_pad])
    in_specs = ([pl.BlockSpec((1, E, T + 1), lambda b: (b, 0, 0))]
                + [pl.BlockSpec(a.shape, lambda b: (0, 0)) for a in weight_args])
    out_spec = pl.BlockSpec((1, 1, 128), lambda b: (b, 0, 0))

    out_pad = pl.pallas_call(
        kernel,
        out_shape=jax.ShapeDtypeStruct((Bsz, 1, 128), jnp.float32),
        grid=(Bsz,),
        in_specs=in_specs,
        out_specs=out_spec,
        compiler_params=pltpu.CompilerParams(
            dimension_semantics=("parallel",)),
    )(x_aug, *weight_args)
    return out_pad[:, 0, :ncls]


# ---------------------------------------------------------------------------
# Deterministic parameter construction + demo run.
# ---------------------------------------------------------------------------
def make_params(key, sampling_rate, chunk_size, num_T, num_S, hid, num_classes):
    windows = [0.5, 0.25, 0.125]
    ksizes = [int(w * sampling_rate) for w in windows]
    tiblock_dim = sum((chunk_size - k + 1) // 8 for k in ksizes)

    ks = jax.random.split(key, 24)
    n = lambda k, shp, s=0.1: s * jax.random.normal(k, shp, jnp.float32)
    p = {}
    for i, K in enumerate(ksizes):
        p[f"tw{i + 1}"] = n(ks[i], (num_T, 1, 1, K))
        p[f"tb{i + 1}"] = n(ks[3 + i], (num_T,))
    p["t_gamma"] = 1.0 + n(ks[6], (num_T,))
    p["t_beta"] = n(ks[7], (num_T,))
    p["t_mean"] = n(ks[8], (num_T,))
    p["t_var"] = 1.0 + jnp.abs(n(ks[9], (num_T,)))
    for j, sc in enumerate([3, 5]):
        p[f"sw{j + 1}"] = n(ks[10 + j], (num_S, num_T, sc, sc * tiblock_dim), 0.05)
        p[f"sb{j + 1}"] = n(ks[12 + j], (num_S,))
    p["s_gamma"] = 1.0 + n(ks[14], (num_S,))
    p["s_beta"] = n(ks[15], (num_S,))
    p["s_mean"] = n(ks[16], (num_S,))
    p["s_var"] = 1.0 + jnp.abs(n(ks[17], (num_S,)))
    p["fc1_w"] = n(ks[18], (num_S, hid))
    p["fc1_b"] = n(ks[19], (hid,))
    p["fc2_w"] = n(ks[20], (hid, num_classes))
    p["fc2_b"] = n(ks[21], (num_classes,))
    return p, tiblock_dim


if __name__ == "__main__":
    # Small config consistent with the module.
    sampling_rate = 64
    chunk_size = 64
    batch = 2
    num_T = num_S = 8
    hid_channels = 32
    num_classes = 2

    # 16 electrodes on a 6 x 7 grid (grid dims derived like the torch module).
    channel_location_dict = {
        "E0": (0, 1), "E1": (0, 3), "E2": (0, 5),
        "E3": (1, 0), "E4": (1, 2), "E5": (1, 4), "E6": (1, 6),
        "E7": (2, 1), "E8": (2, 3), "E9": (2, 5),
        "E10": (3, 0), "E11": (3, 2), "E12": (3, 4), "E13": (3, 6),
        "E14": (4, 3), "E15": (5, 3),
    }
    loc_list = list(channel_location_dict.values())
    ys_ = [loc[0] for loc in loc_list if loc is not None]
    xs_ = [loc[1] for loc in loc_list if loc is not None]
    grid_w = max(xs_) + 1
    grid_h = max(ys_) + 1
    num_electrodes = len(loc_list)

    key = jax.random.PRNGKey(0)
    pkey, xkey = jax.random.split(key)
    params, tiblock_dim = make_params(pkey, sampling_rate, chunk_size,
                                      num_T, num_S, hid_channels, num_classes)

    # Input in PyTorch NCHW convention: (B, in_channels=1, electrodes, time).
    x = jax.random.normal(xkey, (batch, 1, num_electrodes, chunk_size), jnp.float32)

    fwd = jax.jit(partial(exp_model_forward, loc_list=loc_list,
                          grid_h=grid_h, grid_w=grid_w))
    out = fwd(x, params)
    out = jax.block_until_ready(out)
    assert out.shape == (batch, num_classes), out.shape
    assert bool(jnp.all(jnp.isfinite(out)))
    print("KERNEL_OK")
</pallas_src>

<mosaic_0001>
module attributes {stable_mosaic.version = 11 : i64} {
  func.func @_exp_model_kernel(%arg0: i32, %arg1: memref<1x16x65xbf16, #tpu.memory_space<vmem>>, %arg2: memref<65x256xbf16, #tpu.memory_space<vmem>>, %arg3: memref<65x384xbf16, #tpu.memory_space<vmem>>, %arg4: memref<65x448xbf16, #tpu.memory_space<vmem>>, %arg5: memref<256x32xbf16, #tpu.memory_space<vmem>>, %arg6: memref<384x48xbf16, #tpu.memory_space<vmem>>, %arg7: memref<448x56xbf16, #tpu.memory_space<vmem>>, %arg8: memref<1x32xf32, #tpu.memory_space<vmem>>, %arg9: memref<1x48xf32, #tpu.memory_space<vmem>>, %arg10: memref<1x56xf32, #tpu.memory_space<vmem>>, %arg11: memref<136x2560xbf16, #tpu.memory_space<vmem>>, %arg12: memref<136x768xbf16, #tpu.memory_space<vmem>>, %arg13: memref<1x160xf32, #tpu.memory_space<vmem>>, %arg14: memref<1x48xf32, #tpu.memory_space<vmem>>, %arg15: memref<160x8xf32, #tpu.memory_space<vmem>>, %arg16: memref<48x8xf32, #tpu.memory_space<vmem>>, %arg17: memref<8x32xf32, #tpu.memory_space<vmem>>, %arg18: memref<1x32xf32, #tpu.memory_space<vmem>>, %arg19: memref<32x128xf32, #tpu.memory_space<vmem>>, %arg20: memref<1x128xf32, #tpu.memory_space<vmem>>, %arg21: memref<1x1x128xf32, #tpu.memory_space<vmem>>) attributes {dimension_semantics = [#tpu.dimension_semantics<parallel>], iteration_bounds = array<i64: 2>, scalar_prefetch = 0 : i64, scratch_operands = 0 : i64, tpu.core_type = #tpu.core_type<tc>, window_params = [{transform_indices = @transform_0, window_bounds = array<i64: 1, 16, 65>}, {pipeline_mode = #tpu.pipeline_mode<synchronous>, transform_indices = @transform_1, window_bounds = array<i64: 65, 256>}, {pipeline_mode = #tpu.pipeline_mode<synchronous>, transform_indices = @transform_2, window_bounds = array<i64: 65, 384>}, {pipeline_mode = #tpu.pipeline_mode<synchronous>, transform_indices = @transform_3, window_bounds = array<i64: 65, 448>}, {pipeline_mode = #tpu.pipeline_mode<synchronous>, transform_indices = @transform_4, window_bounds = array<i64: 256, 32>}, {pipeline_mode = #tpu.pipeline_mode<synchronous>, transform_indices = @transform_5, window_bounds = array<i64: 384, 48>}, {pipeline_mode = #tpu.pipeline_mode<synchronous>, transform_indices = @transform_6, window_bounds = array<i64: 448, 56>}, {pipeline_mode = #tpu.pipeline_mode<synchronous>, transform_indices = @transform_7, window_bounds = array<i64: 1, 32>}, {pipeline_mode = #tpu.pipeline_mode<synchronous>, transform_indices = @transform_8, window_bounds = array<i64: 1, 48>}, {pipeline_mode = #tpu.pipeline_mode<synchronous>, transform_indices = @transform_9, window_bounds = array<i64: 1, 56>}, {pipeline_mode = #tpu.pipeline_mode<synchronous>, transform_indices = @transform_10, window_bounds = array<i64: 136, 2560>}, {pipeline_mode = #tpu.pipeline_mode<synchronous>, transform_indices = @transform_11, window_bounds = array<i64: 136, 768>}, {pipeline_mode = #tpu.pipeline_mode<synchronous>, transform_indices = @transform_12, window_bounds = array<i64: 1, 160>}, {pipeline_mode = #tpu.pipeline_mode<synchronous>, transform_indices = @transform_13, window_bounds = array<i64: 1, 48>}, {pipeline_mode = #tpu.pipeline_mode<synchronous>, transform_indices = @transform_14, window_bounds = array<i64: 160, 8>}, {pipeline_mode = #tpu.pipeline_mode<synchronous>, transform_indices = @transform_15, window_bounds = array<i64: 48, 8>}, {pipeline_mode = #tpu.pipeline_mode<synchronous>, transform_indices = @transform_16, window_bounds = array<i64: 8, 32>}, {pipeline_mode = #tpu.pipeline_mode<synchronous>, transform_indices = @transform_17, window_bounds = array<i64: 1, 32>}, {pipeline_mode = #tpu.pipeline_mode<synchronous>, transform_indices = @transform_18, window_bounds = array<i64: 32, 128>}, {pipeline_mode = #tpu.pipeline_mode<synchronous>, transform_indices = @transform_19, window_bounds = array<i64: 1, 128>}, {transform_indices = @transform_20, window_bounds = array<i64: 1, 1, 128>}]} {
    %c0 = arith.constant 0 : index
    %c0_0 = arith.constant 0 : index
    %c0_1 = arith.constant 0 : index
    %0 = vector.load %arg1[%c0, %c0_0, %c0_1] : memref<1x16x65xbf16, #tpu.memory_space<vmem>>, vector<1x16x65xbf16>
    %1 = vector.shape_cast %0 : vector<1x16x65xbf16> to vector<16x65xbf16>
    %c0_2 = arith.constant 0 : index
    %c0_3 = arith.constant 0 : index
    %2 = vector.load %arg2[%c0_2, %c0_3] : memref<65x256xbf16, #tpu.memory_space<vmem>>, vector<65x256xbf16>
    %cst = arith.constant dense<0.000000e+00> : vector<16x256xf32>
    %3 = tpu.matmul %1, %2, %cst {dimension_numbers = #tpu.dot_dimension_numbers<[1], [0], [0], [1], [0, 0, 1, 1], [], []>} : vector<16x65xbf16>, vector<65x256xbf16>, vector<16x256xf32> -> vector<16x256xf32>
    %cst_4 = arith.constant 0.00999999977 : f32
    %4 = vector.broadcast %cst_4 : f32 to vector<16x256xf32>
    %5 = arith.mulf %4, %3 : vector<16x256xf32>
    %6 = arith.maximumf %3, %5 : vector<16x256xf32>
    %7 = arith.truncf %6 : vector<16x256xf32> to vector<16x256xbf16>
    %c0_5 = arith.constant 0 : index
    %c0_6 = arith.constant 0 : index
    %8 = vector.load %arg5[%c0_5, %c0_6] : memref<256x32xbf16, #tpu.memory_space<vmem>>, vector<256x32xbf16>
    %cst_7 = arith.constant dense<0.000000e+00> : vector<16x32xf32>
    %9 = tpu.matmul %7, %8, %cst_7 {dimension_numbers = #tpu.dot_dimension_numbers<[1], [0], [0], [1], [0, 0, 1, 1], [], []>} : vector<16x256xbf16>, vector<256x32xbf16>, vector<16x32xf32> -> vector<16x32xf32>
    %c0_8 = arith.constant 0 : index
    %c0_9 = arith.constant 0 : index
    %10 = vector.load %arg8[%c0_8, %c0_9] : memref<1x32xf32, #tpu.memory_space<vmem>>, vector<1x32xf32>
    %11 = vector.broadcast %10 : vector<1x32xf32> to vector<16x32xf32>
    %12 = arith.addf %9, %11 : vector<16x32xf32>
    %13 = arith.truncf %12 : vector<16x32xf32> to vector<16x32xbf16>
    %c0_10 = arith.constant 0 : index
    %c0_11 = arith.constant 0 : index
    %14 = vector.load %arg3[%c0_10, %c0_11] : memref<65x384xbf16, #tpu.memory_space<vmem>>, vector<65x384xbf16>
    %cst_12 = arith.constant dense<0.000000e+00> : vector<16x384xf32>
    %15 = tpu.matmul %1, %14, %cst_12 {dimension_numbers = #tpu.dot_dimension_numbers<[1], [0], [0], [1], [0, 0, 1, 1], [], []>} : vector<16x65xbf16>, vector<65x384xbf16>, vector<16x384xf32> -> vector<16x384xf32>
    %cst_13 = arith.constant 0.00999999977 : f32
    %16 = vector.broadcast %cst_13 : f32 to vector<16x384xf32>
    %17 = arith.mulf %16, %15 : vector<16x384xf32>
    %18 = arith.maximumf %15, %17 : vector<16x384xf32>
    %19 = arith.truncf %18 : vector<16x384xf32> to vector<16x384xbf16>
    %c0_14 = arith.constant 0 : index
    %c0_15 = arith.constant 0 : index
    %20 = vector.load %arg6[%c0_14, %c0_15] : memref<384x48xbf16, #tpu.memory_space<vmem>>, vector<384x48xbf16>
    %cst_16 = arith.constant dense<0.000000e+00> : vector<16x48xf32>
    %21 = tpu.matmul %19, %20, %cst_16 {dimension_numbers = #tpu.dot_dimension_numbers<[1], [0], [0], [1], [0, 0, 1, 1], [], []>} : vector<16x384xbf16>, vector<384x48xbf16>, vector<16x48xf32> -> vector<16x48xf32>
    %c0_17 = arith.constant 0 : index
    %c0_18 = arith.constant 0 : index
    %22 = vector.load %arg9[%c0_17, %c0_18] : memref<1x48xf32, #tpu.memory_space<vmem>>, vector<1x48xf32>
    %23 = vector.broadcast %22 : vector<1x48xf32> to vector<16x48xf32>
    %24 = arith.addf %21, %23 : vector<16x48xf32>
    %25 = arith.truncf %24 : vector<16x48xf32> to vector<16x48xbf16>
    %c0_19 = arith.constant 0 : index
    %c0_20 = arith.constant 0 : index
    %26 = vector.load %arg4[%c0_19, %c0_20] : memref<65x448xbf16, #tpu.memory_space<vmem>>, vector<65x448xbf16>
    %cst_21 = arith.constant dense<0.000000e+00> : vector<16x448xf32>
    %27 = tpu.matmul %1, %26, %cst_21 {dimension_numbers = #tpu.dot_dimension_numbers<[1], [0], [0], [1], [0, 0, 1, 1], [], []>} : vector<16x65xbf16>, vector<65x448xbf16>, vector<16x448xf32> -> vector<16x448xf32>
    %cst_22 = arith.constant 0.00999999977 : f32
    %28 = vector.broadcast %cst_22 : f32 to vector<16x448xf32>
    %29 = arith.mulf %28, %27 : vector<16x448xf32>
    %30 = arith.maximumf %27, %29 : vector<16x448xf32>
    %31 = arith.truncf %30 : vector<16x448xf32> to vector<16x448xbf16>
    %c0_23 = arith.constant 0 : index
    %c0_24 = arith.constant 0 : index
    %32 = vector.load %arg7[%c0_23, %c0_24] : memref<448x56xbf16, #tpu.memory_space<vmem>>, vector<448x56xbf16>
    %cst_25 = arith.constant dense<0.000000e+00> : vector<16x56xf32>
    %33 = tpu.matmul %31, %32, %cst_25 {dimension_numbers = #tpu.dot_dimension_numbers<[1], [0], [0], [1], [0, 0, 1, 1], [], []>} : vector<16x448xbf16>, vector<448x56xbf16>, vector<16x56xf32> -> vector<16x56xf32>
    %c0_26 = arith.constant 0 : index
    %c0_27 = arith.constant 0 : index
    %34 = vector.load %arg10[%c0_26, %c0_27] : memref<1x56xf32, #tpu.memory_space<vmem>>, vector<1x56xf32>
    %35 = vector.broadcast %34 : vector<1x56xf32> to vector<16x56xf32>
    %36 = arith.addf %33, %35 : vector<16x56xf32>
    %37 = arith.truncf %36 : vector<16x56xf32> to vector<16x56xbf16>
    %c0_28 = arith.constant 0 : index
    %c0_29 = arith.constant 0 : index
    %38 = vector.load %arg11[%c0_28, %c0_29] : memref<136x2560xbf16, #tpu.memory_space<vmem>>, vector<32x2560xbf16>
    %cst_30 = arith.constant dense<0.000000e+00> : vector<16x2560xf32>
    %39 = tpu.matmul %13, %38, %cst_30 {dimension_numbers = #tpu.dot_dimension_numbers<[1], [0], [0], [1], [0, 0, 1, 1], [], []>} : vector<16x32xbf16>, vector<32x2560xbf16>, vector<16x2560xf32> -> vector<16x2560xf32>
    %c32 = arith.constant 32 : index
    %c0_31 = arith.constant 0 : index
    %40 = vector.load %arg11[%c32, %c0_31] : memref<136x2560xbf16, #tpu.memory_space<vmem>>, vector<48x2560xbf16>
    %cst_32 = arith.constant dense<0.000000e+00> : vector<16x2560xf32>
    %41 = tpu.matmul %25, %40, %cst_32 {dimension_numbers = #tpu.dot_dimension_numbers<[1], [0], [0], [1], [0, 0, 1, 1], [], []>} : vector<16x48xbf16>, vector<48x2560xbf16>, vector<16x2560xf32> -> vector<16x2560xf32>
    %42 = arith.addf %39, %41 : vector<16x2560xf32>
    %c80 = arith.constant 80 : index
    %c0_33 = arith.constant 0 : index
    %43 = vector.load %arg11[%c80, %c0_33] : memref<136x2560xbf16, #tpu.memory_space<vmem>>, vector<56x2560xbf16>
    %cst_34 = arith.constant dense<0.000000e+00> : vector<16x2560xf32>
    %44 = tpu.matmul %37, %43, %cst_34 {dimension_numbers = #tpu.dot_dimension_numbers<[1], [0], [0], [1], [0, 0, 1, 1], [], []>} : vector<16x56xbf16>, vector<56x2560xbf16>, vector<16x2560xf32> -> vector<16x2560xf32>
    %45 = arith.addf %42, %44 : vector<16x2560xf32>
    %46 = vector.extract_strided_slice %45 {offsets = [0, 0], sizes = [1, 160], strides = [1, 1]} : vector<16x2560xf32> to vector<1x160xf32>
    %47 = vector.extract_strided_slice %45 {offsets = [1, 160], sizes = [1, 160], strides = [1, 1]} : vector<16x2560xf32> to vector<1x160xf32>
    %48 = arith.addf %46, %47 : vector<1x160xf32>
    %49 = vector.extract_strided_slice %45 {offsets = [2, 320], sizes = [1, 160], strides = [1, 1]} : vector<16x2560xf32> to vector<1x160xf32>
    %50 = arith.addf %48, %49 : vector<1x160xf32>
    %51 = vector.extract_strided_slice %45 {offsets = [3, 480], sizes = [1, 160], strides = [1, 1]} : vector<16x2560xf32> to vector<1x160xf32>
    %52 = arith.addf %50, %51 : vector<1x160xf32>
    %53 = vector.extract_strided_slice %45 {offsets = [4, 640], sizes = [1, 160], strides = [1, 1]} : vector<16x2560xf32> to vector<1x160xf32>
    %54 = arith.addf %52, %53 : vector<1x160xf32>
    %55 = vector.extract_strided_slice %45 {offsets = [5, 800], sizes = [1, 160], strides = [1, 1]} : vector<16x2560xf32> to vector<1x160xf32>
    %56 = arith.addf %54, %55 : vector<1x160xf32>
    %57 = vector.extract_strided_slice %45 {offsets = [6, 960], sizes = [1, 160], strides = [1, 1]} : vector<16x2560xf32> to vector<1x160xf32>
    %58 = arith.addf %56, %57 : vector<1x160xf32>
    %59 = vector.extract_strided_slice %45 {offsets = [7, 1120], sizes = [1, 160], strides = [1, 1]} : vector<16x2560xf32> to vector<1x160xf32>
    %60 = arith.addf %58, %59 : vector<1x160xf32>
    %61 = vector.extract_strided_slice %45 {offsets = [8, 1280], sizes = [1, 160], strides = [1, 1]} : vector<16x2560xf32> to vector<1x160xf32>
    %62 = arith.addf %60, %61 : vector<1x160xf32>
    %63 = vector.extract_strided_slice %45 {offsets = [9, 1440], sizes = [1, 160], strides = [1, 1]} : vector<16x2560xf32> to vector<1x160xf32>
    %64 = arith.addf %62, %63 : vector<1x160xf32>
    %65 = vector.extract_strided_slice %45 {offsets = [10, 1600], sizes = [1, 160], strides = [1, 1]} : vector<16x2560xf32> to vector<1x160xf32>
    %66 = arith.addf %64, %65 : vector<1x160xf32>
    %67 = vector.extract_strided_slice %45 {offsets = [11, 1760], sizes = [1, 160], strides = [1, 1]} : vector<16x2560xf32> to vector<1x160xf32>
    %68 = arith.addf %66, %67 : vector<1x160xf32>
    %69 = vector.extract_strided_slice %45 {offsets = [12, 1920], sizes = [1, 160], strides = [1, 1]} : vector<16x2560xf32> to vector<1x160xf32>
    %70 = arith.addf %68, %69 : vector<1x160xf32>
    %71 = vector.extract_strided_slice %45 {offsets = [13, 2080], sizes = [1, 160], strides = [1, 1]} : vector<16x2560xf32> to vector<1x160xf32>
    %72 = arith.addf %70, %71 : vector<1x160xf32>
    %73 = vector.extract_strided_slice %45 {offsets = [14, 2240], sizes = [1, 160], strides = [1, 1]} : vector<16x2560xf32> to vector<1x160xf32>
    %74 = arith.addf %72, %73 : vector<1x160xf32>
    %75 = vector.extract_strided_slice %45 {offsets = [15, 2400], sizes = [1, 160], strides = [1, 1]} : vector<16x2560xf32> to vector<1x160xf32>
    %76 = arith.addf %74, %75 : vector<1x160xf32>
    %c0_35 = arith.constant 0 : index
    %c0_36 = arith.constant 0 : index
    %77 = vector.load %arg13[%c0_35, %c0_36] : memref<1x160xf32, #tpu.memory_space<vmem>>, vector<1x160xf32>
    %78 = arith.addf %76, %77 : vector<1x160xf32>
    %cst_37 = arith.constant 0.00999999977 : f32
    %79 = vector.broadcast %cst_37 : f32 to vector<1x160xf32>
    %80 = arith.mulf %79, %78 : vector<1x160xf32>
    %81 = arith.maximumf %78, %80 : vector<1x160xf32>
    %c0_38 = arith.constant 0 : index
    %c0_39 = arith.constant 0 : index
    %82 = vector.load %arg15[%c0_38, %c0_39] : memref<160x8xf32, #tpu.memory_space<vmem>>, vector<160x8xf32>
    %cst_40 = arith.constant dense<0.000000e+00> : vector<1x8xf32>
    %83 = tpu.matmul %81, %82, %cst_40 {dimension_numbers = #tpu.dot_dimension_numbers<[1], [0], [0], [1], [0, 0, 1, 1], [], []>} : vector<1x160xf32>, vector<160x8xf32>, vector<1x8xf32> -> vector<1x8xf32>
    %c0_41 = arith.constant 0 : index
    %c0_42 = arith.constant 0 : index
    %84 = vector.load %arg12[%c0_41, %c0_42] : memref<136x768xbf16, #tpu.memory_space<vmem>>, vector<32x768xbf16>
    %cst_43 = arith.constant dense<0.000000e+00> : vector<16x768xf32>
    %85 = tpu.matmul %13, %84, %cst_43 {dimension_numbers = #tpu.dot_dimension_numbers<[1], [0], [0], [1], [0, 0, 1, 1], [], []>} : vector<16x32xbf16>, vector<32x768xbf16>, vector<16x768xf32> -> vector<16x768xf32>
    %c32_44 = arith.constant 32 : index
    %c0_45 = arith.constant 0 : index
    %86 = vector.load %arg12[%c32_44, %c0_45] : memref<136x768xbf16, #tpu.memory_space<vmem>>, vector<48x768xbf16>
    %cst_46 = arith.constant dense<0.000000e+00> : vector<16x768xf32>
    %87 = tpu.matmul %25, %86, %cst_46 {dimension_numbers = #tpu.dot_dimension_numbers<[1], [0], [0], [1], [0, 0, 1, 1], [], []>} : vector<16x48xbf16>, vector<48x768xbf16>, vector<16x768xf32> -> vector<16x768xf32>
    %88 = arith.addf %85, %87 : vector<16x768xf32>
    %c80_47 = arith.constant 80 : index
    %c0_48 = arith.constant 0 : index
    %89 = vector.load %arg12[%c80_47, %c0_48] : memref<136x768xbf16, #tpu.memory_space<vmem>>, vector<56x768xbf16>
    %cst_49 = arith.constant dense<0.000000e+00> : vector<16x768xf32>
    %90 = tpu.matmul %37, %89, %cst_49 {dimension_numbers = #tpu.dot_dimension_numbers<[1], [0], [0], [1], [0, 0, 1, 1], [], []>} : vector<16x56xbf16>, vector<56x768xbf16>, vector<16x768xf32> -> vector<16x768xf32>
    %91 = arith.addf %88, %90 : vector<16x768xf32>
    %92 = vector.extract_strided_slice %91 {offsets = [0, 0], sizes = [1, 48], strides = [1, 1]} : vector<16x768xf32> to vector<1x48xf32>
    %93 = vector.extract_strided_slice %91 {offsets = [1, 48], sizes = [1, 48], strides = [1, 1]} : vector<16x768xf32> to vector<1x48xf32>
    %94 = arith.addf %92, %93 : vector<1x48xf32>
    %95 = vector.extract_strided_slice %91 {offsets = [2, 96], sizes = [1, 48], strides = [1, 1]} : vector<16x768xf32> to vector<1x48xf32>
    %96 = arith.addf %94, %95 : vector<1x48xf32>
    %97 = vector.extract_strided_slice %91 {offsets = [3, 144], sizes = [1, 48], strides = [1, 1]} : vector<16x768xf32> to vector<1x48xf32>
    %98 = arith.addf %96, %97 : vector<1x48xf32>
    %99 = vector.extract_strided_slice %91 {offsets = [4, 192], sizes = [1, 48], strides = [1, 1]} : vector<16x768xf32> to vector<1x48xf32>
    %100 = arith.addf %98, %99 : vector<1x48xf32>
    %101 = vector.extract_strided_slice %91 {offsets = [5, 240], sizes = [1, 48], strides = [1, 1]} : vector<16x768xf32> to vector<1x48xf32>
    %102 = arith.addf %100, %101 : vector<1x48xf32>
    %103 = vector.extract_strided_slice %91 {offsets = [6, 288], sizes = [1, 48], strides = [1, 1]} : vector<16x768xf32> to vector<1x48xf32>
    %104 = arith.addf %102, %103 : vector<1x48xf32>
    %105 = vector.extract_strided_slice %91 {offsets = [7, 336], sizes = [1, 48], strides = [1, 1]} : vector<16x768xf32> to vector<1x48xf32>
    %106 = arith.addf %104, %105 : vector<1x48xf32>
    %107 = vector.extract_strided_slice %91 {offsets = [8, 384], sizes = [1, 48], strides = [1, 1]} : vector<16x768xf32> to vector<1x48xf32>
    %108 = arith.addf %106, %107 : vector<1x48xf32>
    %109 = vector.extract_strided_slice %91 {offsets = [9, 432], sizes = [1, 48], strides = [1, 1]} : vector<16x768xf32> to vector<1x48xf32>
    %110 = arith.addf %108, %109 : vector<1x48xf32>
    %111 = vector.extract_strided_slice %91 {offsets = [10, 480], sizes = [1, 48], strides = [1, 1]} : vector<16x768xf32> to vector<1x48xf32>
    %112 = arith.addf %110, %111 : vector<1x48xf32>
    %113 = vector.extract_strided_slice %91 {offsets = [11, 528], sizes = [1, 48], strides = [1, 1]} : vector<16x768xf32> to vector<1x48xf32>
    %114 = arith.addf %112, %113 : vector<1x48xf32>
    %115 = vector.extract_strided_slice %91 {offsets = [12, 576], sizes = [1, 48], strides = [1, 1]} : vector<16x768xf32> to vector<1x48xf32>
    %116 = arith.addf %114, %115 : vector<1x48xf32>
    %117 = vector.extract_strided_slice %91 {offsets = [13, 624], sizes = [1, 48], strides = [1, 1]} : vector<16x768xf32> to vector<1x48xf32>
    %118 = arith.addf %116, %117 : vector<1x48xf32>
    %119 = vector.extract_strided_slice %91 {offsets = [14, 672], sizes = [1, 48], strides = [1, 1]} : vector<16x768xf32> to vector<1x48xf32>
    %120 = arith.addf %118, %119 : vector<1x48xf32>
    %121 = vector.extract_strided_slice %91 {offsets = [15, 720], sizes = [1, 48], strides = [1, 1]} : vector<16x768xf32> to vector<1x48xf32>
    %122 = arith.addf %120, %121 : vector<1x48xf32>
    %c0_50 = arith.constant 0 : index
    %c0_51 = arith.constant 0 : index
    %123 = vector.load %arg14[%c0_50, %c0_51] : memref<1x48xf32, #tpu.memory_space<vmem>>, vector<1x48xf32>
    %124 = arith.addf %122, %123 : vector<1x48xf32>
    %cst_52 = arith.constant 0.00999999977 : f32
    %125 = vector.broadcast %cst_52 : f32 to vector<1x48xf32>
    %126 = arith.mulf %125, %124 : vector<1x48xf32>
    %127 = arith.maximumf %124, %126 : vector<1x48xf32>
    %c0_53 = arith.constant 0 : index
    %c0_54 = arith.constant 0 : index
    %128 = vector.load %arg16[%c0_53, %c0_54] : memref<48x8xf32, #tpu.memory_space<vmem>>, vector<48x8xf32>
    %cst_55 = arith.constant dense<0.000000e+00> : vector<1x8xf32>
    %129 = tpu.matmul %127, %128, %cst_55 {dimension_numbers = #tpu.dot_dimension_numbers<[1], [0], [0], [1], [0, 0, 1, 1], [], []>} : vector<1x48xf32>, vector<48x8xf32>, vector<1x8xf32> -> vector<1x8xf32>
    %130 = arith.addf %83, %129 : vector<1x8xf32>
    %c0_56 = arith.constant 0 : index
    %c0_57 = arith.constant 0 : index
    %131 = vector.load %arg17[%c0_56, %c0_57] : memref<8x32xf32, #tpu.memory_space<vmem>>, vector<8x32xf32>
    %cst_58 = arith.constant dense<0.000000e+00> : vector<1x32xf32>
    %132 = tpu.matmul %130, %131, %cst_58 {dimension_numbers = #tpu.dot_dimension_numbers<[1], [0], [0], [1], [0, 0, 1, 1], [], []>} : vector<1x8xf32>, vector<8x32xf32>, vector<1x32xf32> -> vector<1x32xf32>
    %c0_59 = arith.constant 0 : index
    %c0_60 = arith.constant 0 : index
    %133 = vector.load %arg18[%c0_59, %c0_60] : memref<1x32xf32, #tpu.memory_space<vmem>>, vector<1x32xf32>
    %134 = arith.addf %132, %133 : vector<1x32xf32>
    %cst_61 = arith.constant 0.000000e+00 : f32
    %135 = vector.broadcast %cst_61 : f32 to vector<1x32xf32>
    %136 = arith.maximumf %134, %135 : vector<1x32xf32>
    %c0_62 = arith.constant 0 : index
    %c0_63 = arith.constant 0 : index
    %137 = vector.load %arg19[%c0_62, %c0_63] : memref<32x128xf32, #tpu.memory_space<vmem>>, vector<32x128xf32>
    %cst_64 = arith.constant dense<0.000000e+00> : vector<1x128xf32>
    %138 = tpu.matmul %136, %137, %cst_64 {dimension_numbers = #tpu.dot_dimension_numbers<[1], [0], [0], [1], [0, 0, 1, 1], [], []>} : vector<1x32xf32>, vector<32x128xf32>, vector<1x128xf32> -> vector<1x128xf32>
    %c0_65 = arith.constant 0 : index
    %c0_66 = arith.constant 0 : index
    %139 = vector.load %arg20[%c0_65, %c0_66] : memref<1x128xf32, #tpu.memory_space<vmem>>, vector<1x128xf32>
    %140 = arith.addf %138, %139 : vector<1x128xf32>
    %c0_67 = arith.constant 0 : index
    %c0_68 = arith.constant 0 : index
    %c0_69 = arith.constant 0 : index
    %141 = vector.load %arg21[%c0_67, %c0_68, %c0_69] : memref<1x1x128xf32, #tpu.memory_space<vmem>>, vector<1x1x128xf32>
    %142 = vector.shape_cast %141 : vector<1x1x128xf32> to vector<1x128xf32>
    %143 = vector.shape_cast %140 : vector<1x128xf32> to vector<1x1x128xf32>
    tpu.vector_store %arg21[%c0_67, %c0_68, %c0_69], %143 {strides = array<i32>} : memref<1x1x128xf32, #tpu.memory_space<vmem>>, vector<1x1x128xf32>,
    return
  }
  func.func @transform_0(%arg0: i32) -> (i32, i32, i32) {
    %c0_i32 = arith.constant 0 : i32
    %c0_i32_0 = arith.constant 0 : i32
    %c0_i32_1 = arith.constant 0 : i32
    return %arg0, %c0_i32, %c0_i32_0 : i32, i32, i32
  }
  func.func @transform_1(%arg0: i32) -> (i32, i32) {
    %c0_i32 = arith.constant 0 : i32
    %c0_i32_0 = arith.constant 0 : i32
    %c0_i32_1 = arith.constant 0 : i32
    return %c0_i32, %c0_i32_0 : i32, i32
  }
  func.func @transform_2(%arg0: i32) -> (i32, i32) {
    %c0_i32 = arith.constant 0 : i32
    %c0_i32_0 = arith.constant 0 : i32
    %c0_i32_1 = arith.constant 0 : i32
    return %c0_i32, %c0_i32_0 : i32, i32
  }
  func.func @transform_3(%arg0: i32) -> (i32, i32) {
    %c0_i32 = arith.constant 0 : i32
    %c0_i32_0 = arith.constant 0 : i32
    %c0_i32_1 = arith.constant 0 : i32
    return %c0_i32, %c0_i32_0 : i32, i32
  }
  func.func @transform_4(%arg0: i32) -> (i32, i32) {
    %c0_i32 = arith.constant 0 : i32
    %c0_i32_0 = arith.constant 0 : i32
    %c0_i32_1 = arith.constant 0 : i32
    return %c0_i32, %c0_i32_0 : i32, i32
  }
  func.func @transform_5(%arg0: i32) -> (i32, i32) {
    %c0_i32 = arith.constant 0 : i32
    %c0_i32_0 = arith.constant 0 : i32
    %c0_i32_1 = arith.constant 0 : i32
    return %c0_i32, %c0_i32_0 : i32, i32
  }
  func.func @transform_6(%arg0: i32) -> (i32, i32) {
    %c0_i32 = arith.constant 0 : i32
    %c0_i32_0 = arith.constant 0 : i32
    %c0_i32_1 = arith.constant 0 : i32
    return %c0_i32, %c0_i32_0 : i32, i32
  }
  func.func @transform_7(%arg0: i32) -> (i32, i32) {
    %c0_i32 = arith.constant 0 : i32
    %c0_i32_0 = arith.constant 0 : i32
    %c0_i32_1 = arith.constant 0 : i32
    return %c0_i32, %c0_i32_0 : i32, i32
  }
  func.func @transform_8(%arg0: i32) -> (i32, i32) {
    %c0_i32 = arith.constant 0 : i32
    %c0_i32_0 = arith.constant 0 : i32
    %c0_i32_1 = arith.constant 0 : i32
    return %c0_i32, %c0_i32_0 : i32, i32
  }
  func.func @transform_9(%arg0: i32) -> (i32, i32) {
    %c0_i32 = arith.constant 0 : i32
    %c0_i32_0 = arith.constant 0 : i32
    %c0_i32_1 = arith.constant 0 : i32
    return %c0_i32, %c0_i32_0 : i32, i32
  }
  func.func @transform_10(%arg0: i32) -> (i32, i32) {
    %c0_i32 = arith.constant 0 : i32
    %c0_i32_0 = arith.constant 0 : i32
    %c0_i32_1 = arith.constant 0 : i32
    return %c0_i32, %c0_i32_0 : i32, i32
  }
  func.func @transform_11(%arg0: i32) -> (i32, i32) {
    %c0_i32 = arith.constant 0 : i32
    %c0_i32_0 = arith.constant 0 : i32
    %c0_i32_1 = arith.constant 0 : i32
    return %c0_i32, %c0_i32_0 : i32, i32
  }
  func.func @transform_12(%arg0: i32) -> (i32, i32) {
    %c0_i32 = arith.constant 0 : i32
    %c0_i32_0 = arith.constant 0 : i32
    %c0_i32_1 = arith.constant 0 : i32
    return %c0_i32, %c0_i32_0 : i32, i32
  }
  func.func @transform_13(%arg0: i32) -> (i32, i32) {
    %c0_i32 = arith.constant 0 : i32
    %c0_i32_0 = arith.constant 0 : i32
    %c0_i32_1 = arith.constant 0 : i32
    return %c0_i32, %c0_i32_0 : i32, i32
  }
  func.func @transform_14(%arg0: i32) -> (i32, i32) {
    %c0_i32 = arith.constant 0 : i32
    %c0_i32_0 = arith.constant 0 : i32
    %c0_i32_1 = arith.constant 0 : i32
    return %c0_i32, %c0_i32_0 : i32, i32
  }
  func.func @transform_15(%arg0: i32) -> (i32, i32) {
    %c0_i32 = arith.constant 0 : i32
    %c0_i32_0 = arith.constant 0 : i32
    %c0_i32_1 = arith.constant 0 : i32
    return %c0_i32, %c0_i32_0 : i32, i32
  }
  func.func @transform_16(%arg0: i32) -> (i32, i32) {
    %c0_i32 = arith.constant 0 : i32
    %c0_i32_0 = arith.constant 0 : i32
    %c0_i32_1 = arith.constant 0 : i32
    return %c0_i32, %c0_i32_0 : i32, i32
  }
  func.func @transform_17(%arg0: i32) -> (i32, i32) {
    %c0_i32 = arith.constant 0 : i32
    %c0_i32_0 = arith.constant 0 : i32
    %c0_i32_1 = arith.constant 0 : i32
    return %c0_i32, %c0_i32_0 : i32, i32
  }
  func.func @transform_18(%arg0: i32) -> (i32, i32) {
    %c0_i32 = arith.constant 0 : i32
    %c0_i32_0 = arith.constant 0 : i32
    %c0_i32_1 = arith.constant 0 : i32
    return %c0_i32, %c0_i32_0 : i32, i32
  }
  func.func @transform_19(%arg0: i32) -> (i32, i32) {
    %c0_i32 = arith.constant 0 : i32
    %c0_i32_0 = arith.constant 0 : i32
    %c0_i32_1 = arith.constant 0 : i32
    return %c0_i32, %c0_i32_0 : i32, i32
  }
  func.func @transform_20(%arg0: i32) -> (i32, i32, i32) {
    %c0_i32 = arith.constant 0 : i32
    %c0_i32_0 = arith.constant 0 : i32
    %c0_i32_1 = arith.constant 0 : i32
    return %arg0, %c0_i32, %c0_i32_0 : i32, i32, i32
  }
}

</mosaic_0001>

<llo_original>
// kernel: tile.13
$region0: #{tile.13}
  #allocation0 [shape = 's32[1]{0}', space=sflag, size = 0x4, scoped, tag = 'scoped memory for tile.13']
  %s0 = inlined_call_operand.vmem [shape: f32[8], index: 0, kind: input, shape index: {}]
  %s1 = inlined_call_operand.vmem [shape: f32[20,8], index: 1, kind: output, shape index: {}]
  // Predicated region
  $region2: #{tile.13} parent=0 // pred_check
    _
  $region3: #{tile.13} parent=0 // pred_check_branch
    %3 = sbr.rel (0) target = $region5
  $region4: #{tile.13} parent=0 // pred_region
    _
  $region5: #{tile.13} parent=0 // pred_fallthru
    _
  %v4 = vld [vmem:[%s0] ss:$0 sm:$0xff]
  %5 = vst [vmem:[%s1] sm:$0xff] %v4
  %s6 = scalar_lea.vmem %s1, 8
  %7 = vst [vmem:[%s6] sm:$0xff] %v4
  %s8 = scalar_lea.vmem %s1, 16
  %9 = vst [vmem:[%s8] sm:$0xff] %v4

// kernel: tile.14
$region0: #{tile.14}
  %s0 = inlined_call_operand.vmem [shape: f32[20,8], index: 0, kind: input, shape index: {}]
  %s1 = inlined_call_operand.vmem [shape: f32[1,160], index: 1, kind: output, shape index: {}]
  $region1: #{tile.14} parent=0
    #allocation0 [shape = 'u8[8192]{0}', space=vmem, size = 0x2000, scoped, tag = 'scoped mem for output reshape']
    %s2 = smov 3
    %v3 = vld [vmem:[%s0] ss:$16 sm:%s2]
    %vm4 = vcmask 64512
    %5 = vst.msk [vmem:[#allocation0] ss:$8 sm:$0x3] %vm4, %v3
    %s6 = scalar_lea.vmem %s0, 15
    %v7 = vld [vmem:[%s6] sm:$0x1]
    %8 = vrot.lane.b32.xlu0 %v7, 120
    %v9 = vpop.permute.xlu0 %8
    %vm10 = vcmask 1048512
    %11 = vst.msk [vmem:[#allocation0] sm:$0x1] %vm10, %v9
    %s12 = scalar_lea.vmem %s0, 14
    %v13 = vld [vmem:[%s12] sm:$0x1]
    %14 = vrot.lane.b32.xlu0 %v13, 112
    %v15 = vpop.permute.xlu0 %14
    %vm16 = vcmask 982912
    %17 = vst.msk [vmem:[#allocation0] sm:$0x1] %vm16, %v15
    %s18 = scalar_lea.vmem %s0, 13
    %v19 = vld [vmem:[%s18] sm:$0x1]
    %20 = vrot.lane.b32.xlu0 %v19, 104
    %v21 = vpop.permute.xlu0 %20
    %vm22 = vcmask 917312
    %23 = vst.msk [vmem:[#allocation0] sm:$0x1] %vm22, %v21
    %s24 = scalar_lea.vmem %s0, 12
    %v25 = vld [vmem:[%s24] sm:$0x1]
    %26 = vrot.lane.b32.xlu0 %v25, 96
    %v27 = vpop.permute.xlu0 %26
    %vm28 = vcmask 851712
    %29 = vst.msk [vmem:[#allocation0] sm:$0x1] %vm28, %v27
    %s30 = scalar_lea.vmem %s0, 11
    %v31 = vld [vmem:[%s30] sm:$0x1]
    %32 = vrot.lane.b32.xlu0 %v31, 88
    %v33 = vpop.permute.xlu0 %32
    %vm34 = vcmask 786112
    %35 = vst.msk [vmem:[#allocation0] sm:$0x1] %vm34, %v33
    %s36 = scalar_lea.vmem %s0, 10
    %v37 = vld [vmem:[%s36] sm:$0x1]
    %38 = vrot.lane.b32.xlu0 %v37, 80
    %v39 = vpop.permute.xlu0 %38
    %vm40 = vcmask 720512
    %41 = vst.msk [vmem:[#allocation0] sm:$0x1] %vm40, %v39
    %s42 = scalar_lea.vmem %s0, 9
    %v43 = vld [vmem:[%s42] sm:$0x1]
    %44 = vrot.lane.b32.xlu0 %v43, 72
    %v45 = vpop.permute.xlu0 %44
    %vm46 = vcmask 654912
    %47 = vst.msk [vmem:[#allocation0] sm:$0x1] %vm46, %v45
    %s48 = scalar_lea.vmem %s0, 8
    %v49 = vld [vmem:[%s48] sm:$0x1]
    %50 = vrot.lane.b32.xlu0 %v49, 64
    %v51 = vpop.permute.xlu0 %50
    %vm52 = vcmask 589312
    %53 = vst.msk [vmem:[#allocation0] sm:$0x1] %vm52, %v51
    %s54 = scalar_lea.vmem %s0, 7
    %v55 = vld [vmem:[%s54] sm:$0x1]
    %56 = vrot.lane.b32.xlu0 %v55, 56
    %v57 = vpop.permute.xlu0 %56
    %vm58 = vcmask 523712
    %59 = vst.msk [vmem:[#allocation0] sm:$0x1] %vm58, %v57
    %s60 = scalar_lea.vmem %s0, 6
    %v61 = vld [vmem:[%s60] sm:$0x1]
    %62 = vrot.lane.b32.xlu0 %v61, 48
    %v63 = vpop.permute.xlu0 %62
    %vm64 = vcmask 458112
    %65 = vst.msk [vmem:[#allocation0] sm:$0x1] %vm64, %v63
    %s66 = scalar_lea.vmem %s0, 5
    %v67 = vld [vmem:[%s66] sm:$0x1]
    %68 = vrot.lane.b32.xlu0 %v67, 40
    %v69 = vpop.permute.xlu0 %68
    %vm70 = vcmask 392512
    %71 = vst.msk [vmem:[#allocation0] sm:$0x1] %vm70, %v69
    %s72 = scalar_lea.vmem %s0, 4
    %v73 = vld [vmem:[%s72] sm:$0x1]
    %74 = vrot.lane.b32.xlu0 %v73, 32
    %v75 = vpop.permute.xlu0 %74
    %vm76 = vcmask 326912
    %77 = vst.msk [vmem:[#allocation0] sm:$0x1] %vm76, %v75
    %s78 = scalar_lea.vmem %s0, 3
    %s79 = smov 3
    %v80 = vld [vmem:[%s78] ss:$16 sm:%s79]
    %81 = vrot.lane.b32.xlu0 %v80, 24
    %v82 = vpop.permute.xlu0 %81
    %vm83 = vcmask 261312
    %84 = vst.msk [vmem:[#allocation0] ss:$8 sm:$0x3] %vm83, %v82
    %s85 = scalar_lea.vmem %s0, 2
    %s86 = smov 3
    %v87 = vld [vmem:[%s85] ss:$16 sm:%s86]
    %88 = vrot.lane.b32.xlu0 %v87, 16
    %v89 = vpop.permute.xlu0 %88
    %vm90 = vcmask 195712
    %91 = vst.msk [vmem:[#allocation0] ss:$8 sm:$0x3] %vm90, %v89
    %s92 = scalar_lea.vmem %s0, 1
    %s93 = smov 3
    %v94 = vld [vmem:[%s92] ss:$16 sm:%s93]
    %95 = vrot.lane.b32.xlu0 %v94, 8
    %v96 = vpop.permute.xlu0 %95
    %vm97 = vcmask 130112
    %98 = vst.msk [vmem:[#allocation0] ss:$8 sm:$0x3] %vm97, %v96
    %s100 = sshllo.u32 0, 1
    %v102 = vld [vmem:[#allocation0] sm:%s100]
    %s103 = sshllo.u32 0, 1
    %104 = vst [vmem:[%s1] sm:%s103] %v102
    %s105 = scalar_lea.vmem [#allocation0], 8
    %v106 = vld [vmem:[%s105] sm:%s100]
    %s107 = sshllo.u32 0, 1
    %s108 = scalar_lea.vmem %s1, 1
    %109 = vst [vmem:[%s108] sm:%s107] %v106

// kernel: tile.18
$region0: #{tile.18}
  #allocation0 [shape = 's32[1]{0}', space=sflag, size = 0x4, scoped, tag = 'scoped memory for tile.18']
  %s0 = inlined_call_operand.vmem [shape: f32[8], index: 0, kind: input, shape index: {}]
  %s1 = inlined_call_operand.vmem [shape: f32[6,8], index: 1, kind: output, shape index: {}]
  // Predicated region
  $region2: #{tile.18} parent=0 // pred_check
    _
  $region3: #{tile.18} parent=0 // pred_check_branch
    %3 = sbr.rel (0) target = $region5
  $region4: #{tile.18} parent=0 // pred_region
    _
  $region5: #{tile.18} parent=0 // pred_fallthru
    _
  %v4 = vld [vmem:[%s0] ss:$0 sm:$0xff]
  %5 = vst [vmem:[%s1] sm:$0xff] %v4

// kernel: tile.19
$region0: #{tile.19}
  %s0 = inlined_call_operand.vmem [shape: f32[6,8], index: 0, kind: input, shape index: {}]
  %s1 = inlined_call_operand.vmem [shape: f32[1,48], index: 1, kind: output, shape index: {}]
  $region1: #{tile.19} parent=0
    #allocation0 [shape = 'u8[4096]{0}', space=vmem, size = 0x1000, scoped, tag = 'scoped mem for output reshape']
    %v2 = vld [vmem:[%s0] sm:$0x1]
    %vm3 = vcmask 64512
    %4 = vst.msk [vmem:[#allocation0] sm:$0x1] %vm3, %v2
    %s5 = scalar_lea.vmem %s0, 5
    %v6 = vld [vmem:[%s5] sm:$0x1]
    %7 = vrot.lane.b32.xlu0 %v6, 40
    %v8 = vpop.permute.xlu0 %7
    %vm9 = vcmask 392512
    %10 = vst.msk [vmem:[#allocation0] sm:$0x1] %vm9, %v8
    %s11 = scalar_lea.vmem %s0, 4
    %v12 = vld [vmem:[%s11] sm:$0x1]
    %13 = vrot.lane.b32.xlu0 %v12, 32
    %v14 = vpop.permute.xlu0 %13
    %vm15 = vcmask 326912
    %16 = vst.msk [vmem:[#allocation0] sm:$0x1] %vm15, %v14
    %s17 = scalar_lea.vmem %s0, 3
    %v18 = vld [vmem:[%s17] sm:$0x1]
    %19 = vrot.lane.b32.xlu0 %v18, 24
    %v20 = vpop.permute.xlu0 %19
    %vm21 = vcmask 261312
    %22 = vst.msk [vmem:[#allocation0] sm:$0x1] %vm21, %v20
    %s23 = scalar_lea.vmem %s0, 2
    %v24 = vld [vmem:[%s23] sm:$0x1]
    %25 = vrot.lane.b32.xlu0 %v24, 16
    %v26 = vpop.permute.xlu0 %25
    %vm27 = vcmask 195712
    %28 = vst.msk [vmem:[#allocation0] sm:$0x1] %vm27, %v26
    %s29 = scalar_lea.vmem %s0, 1
    %v30 = vld [vmem:[%s29] sm:$0x1]
    %31 = vrot.lane.b32.xlu0 %v30, 8
    %v32 = vpop.permute.xlu0 %31
    %vm33 = vcmask 130112
    %34 = vst.msk [vmem:[#allocation0] sm:$0x1] %vm33, %v32
    %s36 = sshllo.u32 0, 1
    %v38 = vld [vmem:[#allocation0] sm:%s36]
    %s39 = sshllo.u32 0, 1
    %40 = vst [vmem:[%s1] sm:%s39] %v38

</llo_original>
